<compile_context>
chip_gen: v7x
topology: tpu7x:2x2x1
jax: 0.10.0
libtpu: 0.0.40
codegen_flags: <defaults>
</compile_context>

<pallas_src>
import jax
import jax.numpy as jnp
from jax import lax
from jax.experimental import pallas as pl
from jax.experimental.pallas import tpu as pltpu


# --------------------------------------------------------------------------- #
# Kernel
# --------------------------------------------------------------------------- #
def _embedding_kernel(x_ref, w_ref, b_ref, o_ref, acc_ref):
    # x_ref  : (tm, tk)   input tile
    # w_ref  : (tk, tn)   weight tile, pre-transposed to (K, N) at setup
    # b_ref  : (1, tn)    bias tile (f32)
    # o_ref  : (tm, tn)   output tile (resident across the K axis)
    # acc_ref: (tm, tn)   f32 accumulator scratch
    k = pl.program_id(2)

    @pl.when(k == 0)
    def _():
        acc_ref[...] = jnp.zeros_like(acc_ref)

    acc_ref[...] += jnp.dot(x_ref[...], w_ref[...],
                            preferred_element_type=jnp.float32)

    @pl.when(k == pl.num_programs(2) - 1)
    def _():
        y = acc_ref[...] + b_ref[...]                       # f32 epilogue
        # numerically stable log-sigmoid: min(y, 0) - log1p(exp(-|y|))
        ls = jnp.minimum(y, 0.0) - jnp.log1p(jnp.exp(-jnp.abs(y)))
        o_ref[...] = ls.astype(o_ref.dtype)


# --------------------------------------------------------------------------- #
# Tiling / VMEM helpers
# --------------------------------------------------------------------------- #
def _round_up(a, b):
    return ((a + b - 1) // b) * b


def _best_tile(dim, limit, align):
    """Largest tile <= limit (multiple of `align`) minimizing padding of `dim`."""
    limit = max(align, (limit // align) * align)
    if dim <= limit:
        return _round_up(dim, align)
    best_t, best_pad = align, None
    t = limit
    while t >= align:
        pad = pl.cdiv(dim, t) * t - dim
        if best_pad is None or pad < best_pad:
            best_t, best_pad = t, pad
        t -= align
    return best_t


def _tile_vmem_bytes(tm, tn, tk, in_itemsize, out_itemsize):
    # double-buffered x / W / bias inputs + double-buffered output tile
    # + single f32 accumulator scratch.
    return (2 * (tm * tk + tk * tn) * in_itemsize
            + 2 * tn * 4
            + 2 * tm * tn * out_itemsize
            + tm * tn * 4)


def _default_vmem_budget():
    """~7/16 of VMEM capacity: ~28 MiB on v7x (64 MiB), 56 MiB on v5e/v6e (128 MiB)."""
    cap = 64 * 1024 * 1024
    try:
        info = pltpu.get_tpu_info()
        cap = int(getattr(info, "vmem_capacity_bytes", cap) or cap)
    except Exception:
        pass
    return int(min(cap * 7 // 16, 56 * 1024 * 1024))


def _choose_tiles(M, N, K, in_itemsize, out_itemsize, budget):
    sub = 8 if in_itemsize >= 4 else 16         # sublane packing (f32 vs bf16)
    tm = _best_tile(M, 512, sub)
    tn = _best_tile(N, 512, 128)

    # Prefer no K tiling (weight slab resident across the reduction) when it
    # fits the budget; otherwise tile K in 128-multiples so tm/tn stay large.
    tk = K
    if _tile_vmem_bytes(tm, tn, tk, in_itemsize, out_itemsize) > budget:
        tk = _best_tile(K, 512, 128)
    while (_tile_vmem_bytes(tm, tn, tk, in_itemsize, out_itemsize) > budget
           and tk > 128):
        tk = max(128, (tk // 2) // 128 * 128)
    # Shrink tn toward 256 then 128 (v6e/v7x MXU is 256-wide), then tm.
    while (_tile_vmem_bytes(tm, tn, tk, in_itemsize, out_itemsize) > budget
           and tn > 128):
        tn = max(128, (tn // 2) // 128 * 128)
    while (_tile_vmem_bytes(tm, tn, tk, in_itemsize, out_itemsize) > budget
           and tm > sub):
        tm = max(sub, (tm // 2) // sub * sub)
    return tm, tn, tk


# --------------------------------------------------------------------------- #
# Layer factory: prepare parameters ONCE, return a forward(x) closure
# --------------------------------------------------------------------------- #
def make_embedding_layer(weight, bias, *, compute_dtype=None,
                         tm=None, tn=None, tk=None,
                         vmem_budget_bytes=None, interpret=False):
    """weight: (N, K) PyTorch nn.Linear layout; bias: (N,). Returns forward(x)->(M,N).

    All parameter padding / casting / transposition happens here (amortized),
    never in the per-call forward.
    """
    N, K = weight.shape
    assert bias.shape == (N,), "bias shape mismatch"

    if compute_dtype is not None:
        weight = weight.astype(compute_dtype)
    in_itemsize = jnp.dtype(weight.dtype).itemsize
    sub = 8 if in_itemsize >= 4 else 16
    budget = (vmem_budget_bytes if vmem_budget_bytes is not None
              else _default_vmem_budget())

    # Conservative tile sizing: assume tm up to 512; actual tm picked per call.
    a_tm, a_tn, a_tk = _choose_tiles(512, N, K, in_itemsize, 4, budget)
    tm_cap = a_tm
    tn = tn if tn is not None else a_tn
    tk = tk if tk is not None else a_tk

    # Validate (caller-supplied overrides included) against TPU tiling rules.
    assert tn % 128 == 0, "tn must be a multiple of 128"
    assert tk == K or tk % 128 == 0, "tk must equal K or be a multiple of 128"
    if tm is not None:
        assert tm % sub == 0, f"tm must be a multiple of {sub}"

    N_pad = pl.cdiv(N, tn) * tn
    K_pad = pl.cdiv(K, tk) * tk

    # One-time parameter preparation: pad -> transpose to (K_pad, N_pad).
    w_p = weight
    if N_pad != N or K_pad != K:
        w_p = jnp.pad(w_p, ((0, N_pad - N), (0, K_pad - K)))
    w_t = jnp.transpose(w_p)                                   # (K_pad, N_pad)
    bias_row = jnp.pad(bias.astype(jnp.float32), (0, N_pad - N)).reshape(1, N_pad)

    def forward(x):
        assert x.ndim == 2 and x.shape[1] == K, "input_dim mismatch"
        M = x.shape[0]
        out_dtype = x.dtype
        if compute_dtype is not None:
            x = x.astype(compute_dtype)

        tm_call = tm if tm is not None else _best_tile(M, tm_cap, sub)
        M_pad = pl.cdiv(M, tm_call) * tm_call
        if M_pad != M or K_pad != K:
            x_p = jnp.pad(x, ((0, M_pad - M), (0, K_pad - K)))
        else:
            x_p = x

        gm, gn, gk = M_pad // tm_call, N_pad // tn, K_pad // tk
        out_itemsize = jnp.dtype(out_dtype).itemsize
        usage = _tile_vmem_bytes(tm_call, tn, tk, in_itemsize, out_itemsize)
        vmem_limit = int(min(96 * 1024 * 1024,
                             max(16 * 1024 * 1024, usage + 4 * 1024 * 1024)))

        cost = pl.CostEstimate(
            flops=2 * M_pad * N_pad * K_pad,
            transcendentals=2 * M_pad * N_pad,
            # x re-streamed gn times, W re-streamed gm times (tiled case).
            bytes_accessed=in_itemsize * (gn * M_pad * K_pad + gm * N_pad * K_pad)
                           + 4 * (N_pad + M_pad * N_pad),
        )

        out = pl.pallas_call(
            _embedding_kernel,
            out_shape=jax.ShapeDtypeStruct((M_pad, N_pad), out_dtype),
            grid_spec=pltpu.PrefetchScalarGridSpec(
                num_scalar_prefetch=0,
                grid=(gm, gn, gk),
                in_specs=[
                    pl.BlockSpec((tm_call, tk), lambda i, j, k: (i, k)),  # x
                    pl.BlockSpec((tk, tn), lambda i, j, k: (k, j)),       # W^T
                    pl.BlockSpec((1, tn), lambda i, j, k: (0, j)),        # bias
                ],
                out_specs=pl.BlockSpec((tm_call, tn), lambda i, j, k: (i, j)),
                scratch_shapes=[pltpu.VMEM((tm_call, tn), jnp.float32)],
            ),
            compiler_params=pltpu.CompilerParams(
                dimension_semantics=("parallel", "parallel", "arbitrary"),
                vmem_limit_bytes=vmem_limit,
            ),
            cost_estimate=cost,
            interpret=interpret,
        )(x_p, w_t, bias_row)

        if M_pad != M or N_pad != N:
            out = out[:M, :N]
        return out

    return forward


def embedding_layer_forward(x, weight, bias, **kwargs):
    """Convenience one-shot wrapper (parameter prep not amortized)."""
    return make_embedding_layer(weight, bias, **kwargs)(x)


def _reference(x, weight, bias):
    y = x @ weight.T + bias
    return jnp.minimum(y, 0.0) - jnp.log1p(jnp.exp(-jnp.abs(y)))


if __name__ == "__main__":
    # Shapes consistent with the module's forward: batch=16, input_dim=32,
    # output_dim=128.
    batch, input_dim, output_dim = 16, 32, 128

    key = jax.random.PRNGKey(0)
    kx, kw, kb = jax.random.split(key, 3)

    x = jax.random.normal(kx, (batch, input_dim), dtype=jnp.float32)
    scale = 1.0 / jnp.sqrt(jnp.float32(input_dim))   # ~ nn.Linear init scale
    weight = jax.random.uniform(kw, (output_dim, input_dim),
                                minval=-scale, maxval=scale, dtype=jnp.float32)
    bias = jax.random.uniform(kb, (output_dim,),
                              minval=-scale, maxval=scale, dtype=jnp.float32)

    ref = _reference(x, weight, bias)

    # f32 path: tight tolerance vs. reference.
    fwd = make_embedding_layer(weight, bias)
    out = jax.block_until_ready(fwd(x))
    assert out.shape == (batch, output_dim)
    assert jnp.allclose(out, ref, atol=1e-5, rtol=1e-5), "f32 mismatch vs reference"

    # bf16-operand path (f32 accumulation + f32 epilogue): loose tolerance.
    fwd_bf16 = make_embedding_layer(weight, bias, compute_dtype=jnp.bfloat16)
    out_bf16 = jax.block_until_ready(fwd_bf16(x))
    assert out_bf16.shape == (batch, output_dim)
    assert jnp.allclose(out_bf16, ref, atol=5e-2, rtol=5e-2), "bf16 mismatch vs reference"

    print("KERNEL_OK")
</pallas_src>

<mosaic_0001>
module attributes {stable_mosaic.version = 11 : i64} {
  func.func @_embedding_kernel(%arg0: i32, %arg1: i32, %arg2: i32, %arg3: memref<16x32xf32, #tpu.memory_space<vmem>>, %arg4: memref<32x128xf32, #tpu.memory_space<vmem>>, %arg5: memref<1x128xf32, #tpu.memory_space<vmem>>, %arg6: memref<16x128xf32, #tpu.memory_space<vmem>>, %arg7: memref<16x128xf32, #tpu.memory_space<vmem>>) attributes {dimension_semantics = [#tpu.dimension_semantics<parallel>, #tpu.dimension_semantics<parallel>, #tpu.dimension_semantics<arbitrary>], iteration_bounds = array<i64: 1, 1, 1>, scalar_prefetch = 0 : i64, scratch_operands = 1 : i64, tpu.core_type = #tpu.core_type<tc>, window_params = [{transform_indices = @transform_0, window_bounds = array<i64: 16, 32>}, {transform_indices = @transform_1, window_bounds = array<i64: 32, 128>}, {transform_indices = @transform_2, window_bounds = array<i64: 1, 128>}, {transform_indices = @transform_3, window_bounds = array<i64: 16, 128>}]} {
    %c0_i32 = arith.constant 0 : i32
    %0 = arith.cmpi eq, %arg2, %c0_i32 : i32
    %1 = arith.extui %0 : i1 to i32
    %c0_i32_0 = arith.constant 0 : i32
    %2 = arith.cmpi ne, %1, %c0_i32_0 : i32
    scf.if %2 {
      %cst_10 = arith.constant 0.000000e+00 : f32
      %12 = vector.broadcast %cst_10 : f32 to vector<16x128xf32>
      %c0_11 = arith.constant 0 : index
      %c0_12 = arith.constant 0 : index
      %13 = vector.load %arg7[%c0_11, %c0_12] : memref<16x128xf32, #tpu.memory_space<vmem>>, vector<16x128xf32>
      tpu.vector_store %arg7[%c0_11, %c0_12], %12 {strides = array<i32>} : memref<16x128xf32, #tpu.memory_space<vmem>>, vector<16x128xf32>,
    } else {
    }
    %c0 = arith.constant 0 : index
    %c0_1 = arith.constant 0 : index
    %3 = vector.load %arg7[%c0, %c0_1] : memref<16x128xf32, #tpu.memory_space<vmem>>, vector<16x128xf32>
    %c0_2 = arith.constant 0 : index
    %c0_3 = arith.constant 0 : index
    %4 = vector.load %arg3[%c0_2, %c0_3] : memref<16x32xf32, #tpu.memory_space<vmem>>, vector<16x32xf32>
    %c0_4 = arith.constant 0 : index
    %c0_5 = arith.constant 0 : index
    %5 = vector.load %arg4[%c0_4, %c0_5] : memref<32x128xf32, #tpu.memory_space<vmem>>, vector<32x128xf32>
    %cst = arith.constant dense<0.000000e+00> : vector<16x128xf32>
    %6 = tpu.matmul %4, %5, %cst {dimension_numbers = #tpu.dot_dimension_numbers<[1], [0], [0], [1], [0, 0, 1, 1], [], []>} : vector<16x32xf32>, vector<32x128xf32>, vector<16x128xf32> -> vector<16x128xf32>
    %7 = arith.addf %3, %6 : vector<16x128xf32>
    %c0_6 = arith.constant 0 : index
    %c0_7 = arith.constant 0 : index
    %8 = vector.load %arg7[%c0_6, %c0_7] : memref<16x128xf32, #tpu.memory_space<vmem>>, vector<16x128xf32>
    tpu.vector_store %arg7[%c0_6, %c0_7], %7 {strides = array<i32>} : memref<16x128xf32, #tpu.memory_space<vmem>>, vector<16x128xf32>,
    %c0_i32_8 = arith.constant 0 : i32
    %9 = arith.cmpi eq, %arg2, %c0_i32_8 : i32
    %10 = arith.extui %9 : i1 to i32
    %c0_i32_9 = arith.constant 0 : i32
    %11 = arith.cmpi ne, %10, %c0_i32_9 : i32
    scf.if %11 {
      %c0_10 = arith.constant 0 : index
      %c0_11 = arith.constant 0 : index
      %12 = vector.load %arg7[%c0_10, %c0_11] : memref<16x128xf32, #tpu.memory_space<vmem>>, vector<16x128xf32>
      %c0_12 = arith.constant 0 : index
      %c0_13 = arith.constant 0 : index
      %13 = vector.load %arg5[%c0_12, %c0_13] : memref<1x128xf32, #tpu.memory_space<vmem>>, vector<1x128xf32>
      %14 = vector.broadcast %13 : vector<1x128xf32> to vector<16x128xf32>
      %15 = arith.addf %12, %14 : vector<16x128xf32>
      %cst_14 = arith.constant 0.000000e+00 : f32
      %16 = vector.broadcast %cst_14 : f32 to vector<16x128xf32>
      %17 = arith.minimumf %15, %16 : vector<16x128xf32>
      %18 = math.absf %15 : vector<16x128xf32>
      %cst_15 = arith.constant 0.000000e+00 : f32
      %19 = vector.broadcast %cst_15 : f32 to vector<16x128xf32>
      %20 = arith.subf %19, %18 : vector<16x128xf32>
      %21 = math.exp %20 : vector<16x128xf32>
      %22 = math.log1p %21 : vector<16x128xf32>
      %23 = arith.subf %17, %22 : vector<16x128xf32>
      %c0_16 = arith.constant 0 : index
      %c0_17 = arith.constant 0 : index
      %24 = vector.load %arg6[%c0_16, %c0_17] : memref<16x128xf32, #tpu.memory_space<vmem>>, vector<16x128xf32>
      tpu.vector_store %arg6[%c0_16, %c0_17], %23 {strides = array<i32>} : memref<16x128xf32, #tpu.memory_space<vmem>>, vector<16x128xf32>,
    } else {
    }
    return
  }
  func.func @transform_0(%arg0: i32, %arg1: i32, %arg2: i32) -> (i32, i32) {
    %c0_i32 = arith.constant 0 : i32
    return %arg0, %arg2 : i32, i32
  }
  func.func @transform_1(%arg0: i32, %arg1: i32, %arg2: i32) -> (i32, i32) {
    %c0_i32 = arith.constant 0 : i32
    return %arg2, %arg1 : i32, i32
  }
  func.func @transform_2(%arg0: i32, %arg1: i32, %arg2: i32) -> (i32, i32) {
    %c0_i32 = arith.constant 0 : i32
    %c0_i32_0 = arith.constant 0 : i32
    return %c0_i32, %arg1 : i32, i32
  }
  func.func @transform_3(%arg0: i32, %arg1: i32, %arg2: i32) -> (i32, i32) {
    %c0_i32 = arith.constant 0 : i32
    return %arg0, %arg1 : i32, i32
  }
}

</mosaic_0001>

<llo_original>
// kernel: tpu_custom_call.1
$region0: #{tpu_custom_call.1}
  #allocation0 [shape = 'u32[]', space=smem, size = 0x4, offset = 0x4, fixed_abs, tag = 'smem constant byte address 0x4 - core index']
  #allocation1 [shape = 'u32[144,128]{1,0:T(1,128)}', space=vmem, size = 0x12000, scoped, tag = 'internal scratch']
  #allocation2 [shape = 'f32[16,128]{1,0:T(8,128)}', space=vmem, size = 0x2000, scoped, tag = 'scratch operand']
  %s0 = inlined_call_operand.hbm [shape: f32[16,32], index: 0, kind: input, shape index: {}]
  %s1 = inlined_call_operand.hbm [shape: f32[32,128], index: 1, kind: input, shape index: {}]
  %s2 = inlined_call_operand.vmem [shape: f32[1,128], index: 2, kind: input, shape index: {}]
  %s3 = inlined_call_operand.hbm [shape: f32[16,128], index: 3, kind: output, shape index: {}]
  %s4 = sld [smem:[#allocation0]]
  $region38: #{tpu_custom_call.1} parent=0
    _
  %s6 = ssub.s32 1, %s4
  %s7 = scalar_select 0, %s6, %s4
  $region1: #{tpu_custom_call.1} parent=0
    #allocation3 [shape = 'u8[8192]{0}', space=vmem, size = 0x2000, scoped, tag = 'input window, operand 0, single buffered']
    #allocation4 [shape = 's32[1]{0}', space=sflag, size = 0x4, scoped, tag = 'scoped memory for tpu_custom_call.1']
    #allocation5 [shape = 's32[1]{0}', space=sflag, size = 0x4, scoped, tag = 'scoped memory for tpu_custom_call.1']
    #allocation6 [shape = 'u8[16384]{0}', space=vmem, size = 0x4000, scoped, tag = 'input window, operand 1, single buffered']
    #allocation7 [shape = 's32[1]{0}', space=sflag, size = 0x4, scoped, tag = 'scoped memory for tpu_custom_call.1']
    #allocation8 [shape = 'u8[8192]{0}', space=vmem, size = 0x2000, scoped, tag = 'output window, operand 0, single buffered']
    %8 = vsyncpa [#allocation4], 0
    %9 = vsyncpa [#allocation7], 0
    %10 = vsyncpa [#allocation5], 0
    // Predicated region
    $region2: #{tpu_custom_call.1} parent=1 // pred_check
      _
    $region3: #{tpu_custom_call.1} parent=1 // pred_check_branch
      %12 = sbr.rel (0) target = $region5
    $region4: #{tpu_custom_call.1} parent=1 // pred_region
      %s14 = ssub.s32 256, 256
      %15 = vsyncadd [#allocation4], %s14
      %s16 = sshll.u32 [#allocation3], 4
      %s17 = int_to_ptr.vmem [resolvable:$true] %s16
      %22 = dma.hbm_to_vmem [thread:$0]  %s0, 256, %s17, [#allocation4], 128, 128, 8
    $region5: #{tpu_custom_call.1} parent=1 // pred_fallthru
      _
    // Predicated region
    $region6: #{tpu_custom_call.1} parent=1 // pred_check
      _
    $region7: #{tpu_custom_call.1} parent=1 // pred_check_branch
      %24 = sbr.rel (0) target = $region9
    $region8: #{tpu_custom_call.1} parent=1 // pred_region
      %s26 = ssub.s32 512, 512
      %27 = vsyncadd [#allocation7], %s26
      %s28 = sshll.u32 [#allocation6], 4
      %s29 = int_to_ptr.vmem [resolvable:$true] %s28
      %34 = dma.hbm_to_vmem [thread:$0]  %s1, 512, %s29, [#allocation7], 128, 128, 8
    $region9: #{tpu_custom_call.1} parent=1 // pred_fallthru
      _
    // Predicated region
    $region10: #{tpu_custom_call.1} parent=1 // pred_check
      _
    $region11: #{tpu_custom_call.1} parent=1 // pred_check_branch
      %36 = sbr.rel (0) target = $region13
    $region12: #{tpu_custom_call.1} parent=1 // pred_region
      _
    $region13: #{tpu_custom_call.1} parent=1 // pred_fallthru
      _
    // Predicated region
    $region14: #{tpu_custom_call.1} parent=1 // pred_check
      _
    $region15: #{tpu_custom_call.1} parent=1 // pred_check_branch
      %38 = sbr.rel (0) target = $region17
    $region16: #{tpu_custom_call.1} parent=1 // pred_region
      %39 = dma.done [#allocation4], 256
    $region17: #{tpu_custom_call.1} parent=1 // pred_fallthru
      _
    // Predicated region
    $region18: #{tpu_custom_call.1} parent=1 // pred_check
      _
    $region19: #{tpu_custom_call.1} parent=1 // pred_check_branch
      %41 = sbr.rel (0) target = $region21
    $region20: #{tpu_custom_call.1} parent=1 // pred_region
      %42 = dma.done [#allocation7], 512
    $region21: #{tpu_custom_call.1} parent=1 // pred_fallthru
      _
    %p43 = scmp.eq.s32.totalorder 0, 0
    // Predicated region
    $region22: #{tpu_custom_call.1} parent=1 // pred_check
      %p44 = pneg %p43
    $region23: #{tpu_custom_call.1} parent=1 // pred_check_branch
      %46 = sbr.rel (%p44) target = $region25
    $region24: #{tpu_custom_call.1} parent=1 // pred_region
      %47 = vst [vmem:[#allocation2] sm:$0xff] 0.0
      %48 = vst [vmem:[#allocation2 + $0x8] sm:$0xff] 0.0
    $region25: #{tpu_custom_call.1} parent=1 // pred_fallthru
      _
    %v49 = vld [vmem:[#allocation2] sm:$0xff]
    %v50 = vld [vmem:[#allocation2 + $0x8] sm:$0xff]
    %v51 = vld [vmem:[#allocation3] sm:$0xff]
    %v52 = vld [vmem:[#allocation3 + $0x8] sm:$0xff]
    %v53 = vld [vmem:[#allocation6] sm:$0xff]
    %v54 = vld [vmem:[#allocation6 + $0x8] sm:$0xff]
    %v55 = vld [vmem:[#allocation6 + $0x10] sm:$0xff]
    %v56 = vld [vmem:[#allocation6 + $0x18] sm:$0xff]
    %vm57 = vcmask 261120
    %v59 = vsel %vm57, %v51, 0
    %v62 = vsel %vm57, %v52, 0
    %64 = vmatprep.subr.mxu0 0.0
    %65 = vmatpush1.msra.mxu0 %v53
    %66 = vmatprep.subr.mxu0 0.0
    %67 = vmatpush1.msra.mxu0 %v54
    %68 = vmatprep.subr.mxu0 0.0
    %69 = vmatpush1.msra.mxu0 %v55
    %70 = vmatprep.subr.mxu0 0.0
    %71 = vmatpush1.msra.mxu0 %v56
    %72 = vmatprep.subr.mxu0 0.0
    %73 = vmatpush1.msra.mxu0 0.0
    %74 = vmatprep.subr.mxu0 0.0
    %75 = vmatpush1.msra.mxu0 0.0
    %76 = vmatprep.subr.mxu0 0.0
    %77 = vmatpush1.msra.mxu0 0.0
    %78 = vmatprep.subr.mxu0 0.0
    %79 = vmatpush1.msra.mxu0 0.0
    %80 = vmatprep.subr.mxu0 0.0
    %81 = vmatpush1.msra.mxu0 0.0
    %82 = vmatprep.subr.mxu0 0.0
    %83 = vmatpush1.msra.mxu0 0.0
    %84 = vmatprep.subr.mxu0 0.0
    %85 = vmatpush1.msra.mxu0 0.0
    %86 = vmatprep.subr.mxu0 0.0
    %87 = vmatpush1.msra.mxu0 0.0
    %88 = vmatprep.subr.mxu0 0.0
    %89 = vmatpush1.msra.mxu0 0.0
    %90 = vmatprep.subr.mxu0 0.0
    %91 = vmatpush1.msra.mxu0 0.0
    %92 = vmatprep.subr.mxu0 0.0
    %93 = vmatpush1.msra.mxu0 0.0
    %94 = vmatprep.subr.mxu0 0.0
    %95 = vmatpush1.msra.mxu0 0.0
    %96 = vmatprep.subr.mxu0 0.0
    %97 = vmatpush1.msra.mxu0 0.0
    %98 = vmatprep.subr.mxu0 0.0
    %99 = vmatpush1.msra.mxu0 0.0
    %100 = vmatprep.subr.mxu0 0.0
    %101 = vmatpush1.msra.mxu0 0.0
    %102 = vmatprep.subr.mxu0 0.0
    %103 = vmatpush1.msra.mxu0 0.0
    %104 = vmatprep.subr.mxu0 0.0
    %105 = vmatpush1.msra.mxu0 0.0
    %106 = vmatprep.subr.mxu0 0.0
    %107 = vmatpush1.msra.mxu0 0.0
    %108 = vmatprep.subr.mxu0 0.0
    %109 = vmatpush1.msra.mxu0 0.0
    %110 = vmatprep.subr.mxu0 0.0
    %111 = vmatpush1.msra.mxu0 0.0
    %112 = vmatprep.subr.mxu0 0.0
    %113 = vmatpush1.msra.mxu0 0.0
    %114 = vmatprep.subr.mxu0 0.0
    %115 = vmatpush1.msra.mxu0 0.0
    %116 = vmatprep.subr.mxu0 0.0
    %117 = vmatpush1.msra.mxu0 0.0
    %118 = vmatprep.subr.mxu0 0.0
    %119 = vmatpush1.msra.mxu0 0.0
    %120 = vmatprep.subr.mxu0 0.0
    %121 = vmatpush1.msra.mxu0 0.0
    %122 = vmatprep.subr.mxu0 0.0
    %123 = vmatpush1.msra.mxu0 0.0
    %124 = vmatprep.subr.mxu0 0.0
    %125 = vmatpush1.msra.mxu0 0.0
    %126 = vmatprep.subr.mxu0 0.0
    %127 = vmatpush1.msra.mxu0 0.0
    %128 = vmatprep.mubr.f32.mxu0 0.0
    %129 = vmatmul.mubr.f32.gmra.mrb[0].mxu0 %v59
    %v130 = vpop.f32.mrb[0].mxu0
    %v131 = vadd.f32 0.0, %v130
    %v132 = vpop.f32.mrb[0].mxu0
    %133 = vmatprep.mubr.f32.mxu0 0.0
    %134 = vmatmul.mubr.f32.gmra.mrb[0].mxu0 %v62
    %v135 = vpop.f32.mrb[0].mxu0
    %v136 = vadd.f32 0.0, %v135
    %v137 = vpop.f32.mrb[0].mxu0
    %138 = vdwg.mxu0
    %v139 = vadd.f32 %v49, %v131
    %v140 = vadd.f32 %v50, %v136
    %141 = vst [vmem:[#allocation2] sm:$0xff] %v139
    %142 = vst [vmem:[#allocation2 + $0x8] sm:$0xff] %v140
    // Predicated region
    $region26: #{tpu_custom_call.1} parent=1 // pred_check
      %p143 = pneg %p43
    $region27: #{tpu_custom_call.1} parent=1 // pred_check_branch
      %145 = sbr.rel (%p143) target = $region29
    $region28: #{tpu_custom_call.1} parent=1 // pred_region
      %v146 = vld [vmem:[#allocation2] sm:$0xff]
      %v147 = vld [vmem:[#allocation2 + $0x8] sm:$0xff]
      %v148 = vld [vmem:[%s2] sm:$0x1]
      %v150 = vlaneseq
      %v151 = vshrl.u32 %v150, 7
      %v152 = vsub.s32 0, %v151
      %v153 = vrot.slane %v148, %v152
      %v155 = vadd.f32 %v146, %v153
      %v156 = vadd.f32 %v147, %v153
      %v157 = vmin.f32 %v155, 0.0
      %v158 = vmin.f32 %v156, 0.0
      %v159 = vand.u32 2147483647, %v155
      %v160 = vand.u32 2147483647, %v156
      %v161 = vsub.f32 0.0, %v159
      %v162 = vsub.f32 0.0, %v160
      %v163 = vmul.f32 %v161, 1.442695
      %v164 = vpow.pop %v163
      %v165 = vmul.f32 %v162, 1.442695
      %v166 = vpow.pop %v165
      %v167 = vadd.f32 %v164, 1.0
      %v168 = vlog2.pop %v167
      %v169 = vmul.f32 %v168, 0.6931472
      %v170 = vmul.f32 -0.5, %v164
      %v171 = vadd.f32 %v170, 1.0
      %v172 = vmul.f32 %v171, %v164
      %v173 = vand.u32 2147483647, %v164
      %vm174 = vcmp.lt.f32.partialorder %v173, 0.0004427343
      %v175 = vsel %vm174, %v172, %v169
      %v176 = vadd.f32 %v166, 1.0
      %v177 = vlog2.pop %v176
      %v178 = vmul.f32 %v177, 0.6931472
      %v179 = vmul.f32 -0.5, %v166
      %v180 = vadd.f32 %v179, 1.0
      %v181 = vmul.f32 %v180, %v166
      %v182 = vand.u32 2147483647, %v166
      %vm183 = vcmp.lt.f32.partialorder %v182, 0.0004427343
      %v184 = vsel %vm183, %v181, %v178
      %v185 = vsub.f32 %v157, %v175
      %v186 = vsub.f32 %v158, %v184
      %187 = vst [vmem:[#allocation8] sm:$0xff] %v185
      %188 = vst [vmem:[#allocation8 + $0x8] sm:$0xff] %v186
    $region29: #{tpu_custom_call.1} parent=1 // pred_fallthru
      _
    // Predicated region
    $region30: #{tpu_custom_call.1} parent=1 // pred_check
      _
    $region31: #{tpu_custom_call.1} parent=1 // pred_check_branch
      %190 = sbr.rel (0) target = $region33
    $region32: #{tpu_custom_call.1} parent=1 // pred_region
      %s192 = ssub.s32 256, 256
      %193 = vsyncadd [#allocation5], %s192
      %s194 = sshll.u32 [#allocation8], 4
      %s195 = int_to_ptr.vmem [resolvable:$true] %s194
      %200 = dma.vmem_to_hbm [thread:$0]  %s195, 256, %s3, [#allocation5], 128, 128, 8
    $region33: #{tpu_custom_call.1} parent=1 // pred_fallthru
      _
    // Predicated region
    $region34: #{tpu_custom_call.1} parent=1 // pred_check
      _
    $region35: #{tpu_custom_call.1} parent=1 // pred_check_branch
      %202 = sbr.rel (0) target = $region37
    $region36: #{tpu_custom_call.1} parent=1 // pred_region
      %203 = dma.done [#allocation5], 256
    $region37: #{tpu_custom_call.1} parent=1 // pred_fallthru
      _
    %204 = vsyncpa [#allocation4], 1
    %205 = vsyncpa [#allocation7], 1
    %206 = vsyncpa [#allocation5], 1

</llo_original>
